<compile_context>
chip_gen: v5e
topology: v5e:2x2
jax: 0.10.0
libtpu: 0.0.40
codegen_flags: <defaults>
</compile_context>

<pallas_src>
import functools

import jax
import jax.numpy as jnp
from jax.experimental import pallas as pl
from jax.experimental.pallas import tpu as pltpu


def embed_kernel(ids_ref, table_hbm, pos_ref, out_ref, rows, sems, *,
                 vocab_size, ts):
    # ids_ref   : (B, S)   int32   -- SMEM (scalar prefetch), drives DMA addresses
    # table_hbm : (V, D)   float32 -- raw HBM ref (memory_space=pl.ANY), never in VMEM
    # pos_ref   : (TS, D)  float32 -- positional-encoding slice for this seq tile
    # out_ref   : (1, TS, D) float32
    # rows      : (TS, D)  float32 VMEM scratch -- gathered embedding rows
    # sems      : (TS,)    DMA semaphores, one per gathered row
    b = pl.program_id(0)
    s = pl.program_id(1)
    base = s * ts

    # Issue one row-gather DMA per token in this tile (HBM -> VMEM).
    @pl.loop(0, ts)
    def _(i):
        tok = ids_ref[b, base + i]
        # Clamp: OOB token ids would be an unchecked OOB HBM read on TPU.
        tok = jnp.minimum(jnp.maximum(tok, 0), vocab_size - 1)
        pltpu.make_async_copy(
            table_hbm.at[pl.ds(tok, 1), :],   # (1, D) row in HBM
            rows.at[pl.ds(i, 1), :],          # (1, D) row in VMEM
            sems.at[i],
        ).start()

    # Wait for all row gathers.
    @pl.loop(0, ts)
    def _(i):
        pltpu.make_async_copy(
            table_hbm.at[pl.ds(0, 1), :],
            rows.at[pl.ds(i, 1), :],
            sems.at[i],
        ).wait()

    # tok_emb + pos_emb; dropout is eval-mode identity.
    out_ref[...] = (rows[...] + pos_ref[...])[None, :, :].astype(out_ref.dtype)


def make_positional_encoding(max_len, d_model):
    """Matches PositionalEmbedding.__init__ exactly."""
    pos = jnp.arange(0, max_len, dtype=jnp.float32)[:, None]          # (max_len, 1)
    _2i = jnp.arange(0, d_model, 2, dtype=jnp.float32)                # (d_model//2,)
    div = jnp.power(10000.0, _2i / d_model)                           # (d_model//2,)
    sin_part = jnp.sin(pos / div)                                     # (max_len, d//2)
    cos_part = jnp.cos(pos / div)                                     # (max_len, d//2)
    enc = jnp.zeros((max_len, d_model), dtype=jnp.float32)
    enc = enc.at[:, 0::2].set(sin_part)
    enc = enc.at[:, 1::2].set(cos_part)
    return enc


def make_token_embedding(key, vocab_size, d_model, padding_idx=1):
    """nn.Embedding(vocab_size, d_model, padding_idx=1): N(0,1) init, padding row zeroed."""
    w = jax.random.normal(key, (vocab_size, d_model), dtype=jnp.float32)
    w = w.at[padding_idx, :].set(0.0)
    return w


def transformer_embedding(ids, tok_table, pos_encoding, *, ts=None):
    """Pallas forward: dropout(tok_emb(ids) + pos_enc[:S]) with eval-mode dropout."""
    B, S = ids.shape
    V, D = tok_table.shape
    pos = pos_encoding[:S, :]   # plain-JAX glue, matches self.encoding[:seq_len, :]

    if ts is None:
        ts = min(S, 256)
    assert S % ts == 0, "seq_len must be divisible by the seq tile"
    assert ts == S or ts % 8 == 0, "seq tile must be a multiple of 8 (sublanes)"

    kernel = functools.partial(embed_kernel, vocab_size=V, ts=ts)

    return pl.pallas_call(
        kernel,
        out_shape=jax.ShapeDtypeStruct((B, S, D), jnp.float32),
        grid_spec=pltpu.PrefetchScalarGridSpec(
            num_scalar_prefetch=1,                       # ids -> SMEM
            grid=(B, S // ts),
            in_specs=[
                pl.BlockSpec(memory_space=pl.ANY),       # embedding table stays in HBM
                pl.BlockSpec((ts, D), lambda b, s, ids: (s, 0)),   # pos-enc seq tile
            ],
            out_specs=pl.BlockSpec((1, ts, D), lambda b, s, ids: (b, s, 0)),
            scratch_shapes=[
                pltpu.VMEM((ts, D), jnp.float32),        # gathered embedding rows
                pltpu.SemaphoreType.DMA((ts,)),          # one DMA sem per row
            ],
        ),
        compiler_params=pltpu.CompilerParams(
            dimension_semantics=("parallel", "parallel"),
        ),
    )(ids, tok_table, pos)


if __name__ == "__main__":
    # Small, deterministic config (D kept lane-dense at 128).
    vocab_size = 64
    d_model = 128
    max_len = 64
    batch = 2
    seq_len = 32
    drop_prob = 0.1  # dropout is identity in eval mode

    key = jax.random.PRNGKey(0)
    k_tok, k_ids = jax.random.split(key)

    tok_table = make_token_embedding(k_tok, vocab_size, d_model, padding_idx=1)
    pos_encoding = make_positional_encoding(max_len, d_model)

    ids = jax.random.randint(k_ids, (batch, seq_len), 0, vocab_size, dtype=jnp.int32)

    out = transformer_embedding(ids, tok_table, pos_encoding, ts=16)
    out = jax.block_until_ready(out)

    # Reference check (pure JAX): table gather + positional add.
    ref = tok_table[ids] + pos_encoding[:seq_len][None, :, :]
    assert out.shape == (batch, seq_len, d_model)
    assert jnp.allclose(out, ref, atol=1e-5, rtol=1e-5)

    print("KERNEL_OK")
</pallas_src>

<mosaic_0001>
module attributes {stable_mosaic.version = 11 : i64} {
  func.func @embed_kernel(%arg0: i32, %arg1: i32, %arg2: memref<2x32xi32, #tpu.memory_space<smem>>, %arg3: memref<64x128xf32, #tpu.memory_space<any>>, %arg4: memref<16x128xf32, #tpu.memory_space<vmem>>, %arg5: memref<1x16x128xf32, #tpu.memory_space<vmem>>, %arg6: memref<16x128xf32, #tpu.memory_space<vmem>>, %arg7: memref<16x!tpu.dma_semaphore, #tpu.memory_space<semaphore_mem>>) attributes {dimension_semantics = [#tpu.dimension_semantics<parallel>, #tpu.dimension_semantics<parallel>], iteration_bounds = array<i64: 2, 2>, scalar_prefetch = 1 : i64, scratch_operands = 2 : i64, tpu.core_type = #tpu.core_type<tc>, window_params = [{}, {transform_indices = @transform_1, window_bounds = array<i64: 16, 128>}, {transform_indices = @transform_2, window_bounds = array<i64: 1, 16, 128>}]} {
    %c16_i32 = arith.constant 16 : i32
    %0 = arith.muli %arg1, %c16_i32 : i32
    %c0_i32 = arith.constant 0 : i32
    %c16_i32_0 = arith.constant 16 : i32
    %1 = arith.addi %c0_i32, %c16_i32_0 : i32
    %c1_i32 = arith.constant 1 : i32
    scf.for %arg8 = %c0_i32 to %1 step %c1_i32  : i32 {
      %c1_i32_12 = arith.constant 1 : i32
      %8 = arith.muli %arg8, %c1_i32_12 : i32
      %c0_i32_13 = arith.constant 0 : i32
      %9 = arith.addi %c0_i32_13, %8 : i32
      %10 = arith.addi %0, %9 : i32
      %11 = arith.index_cast %arg0 : i32 to index
      %12 = arith.index_cast %10 : i32 to index
      %13 = memref.load %arg2[%11, %12] : memref<2x32xi32, #tpu.memory_space<smem>>
      %c0_i32_14 = arith.constant 0 : i32
      %14 = arith.maxsi %13, %c0_i32_14 : i32
      %c63_i32 = arith.constant 63 : i32
      %15 = arith.minsi %14, %c63_i32 : i32
      %c0_i32_15 = arith.constant 0 : i32
      %16 = tpu.memref_slice %arg3[%15, %c0_i32_15] : memref<64x128xf32, #tpu.memory_space<any>> -> memref<1x128xf32, #tpu.memory_space<any>>
      %c0_i32_16 = arith.constant 0 : i32
      %17 = tpu.memref_slice %arg6[%9, %c0_i32_16] : memref<16x128xf32, #tpu.memory_space<vmem>> -> memref<1x128xf32, #tpu.memory_space<vmem>>
      %18 = tpu.memref_slice %arg7[%9] : memref<16x!tpu.dma_semaphore, #tpu.memory_space<semaphore_mem>> -> memref<1x!tpu.dma_semaphore, #tpu.memory_space<semaphore_mem>>
      %19 = tpu.memref_squeeze %18 : memref<1x!tpu.dma_semaphore, #tpu.memory_space<semaphore_mem>> -> memref<!tpu.dma_semaphore, #tpu.memory_space<semaphore_mem>>
      tpu.enqueue_dma source(%16 : memref<1x128xf32, #tpu.memory_space<any>>) target(%17 : memref<1x128xf32, #tpu.memory_space<vmem>>) target_semaphore(%19 : memref<!tpu.dma_semaphore, #tpu.memory_space<semaphore_mem>>)
    }
    %c16_i32_1 = arith.constant 16 : i32
    %c0_i32_2 = arith.constant 0 : i32
    %c16_i32_3 = arith.constant 16 : i32
    %2 = arith.addi %c0_i32_2, %c16_i32_3 : i32
    %c1_i32_4 = arith.constant 1 : i32
    scf.for %arg8 = %c0_i32_2 to %2 step %c1_i32_4  : i32 {
      %c1_i32_12 = arith.constant 1 : i32
      %8 = arith.muli %arg8, %c1_i32_12 : i32
      %c0_i32_13 = arith.constant 0 : i32
      %9 = arith.addi %c0_i32_13, %8 : i32
      %c0_i32_14 = arith.constant 0 : i32
      %c0_i32_15 = arith.constant 0 : i32
      %10 = tpu.memref_slice %arg3[%c0_i32_14, %c0_i32_15] : memref<64x128xf32, #tpu.memory_space<any>> -> memref<1x128xf32, #tpu.memory_space<any>>
      %c0_i32_16 = arith.constant 0 : i32
      %11 = tpu.memref_slice %arg6[%9, %c0_i32_16] : memref<16x128xf32, #tpu.memory_space<vmem>> -> memref<1x128xf32, #tpu.memory_space<vmem>>
      %12 = tpu.memref_slice %arg7[%9] : memref<16x!tpu.dma_semaphore, #tpu.memory_space<semaphore_mem>> -> memref<1x!tpu.dma_semaphore, #tpu.memory_space<semaphore_mem>>
      %13 = tpu.memref_squeeze %12 : memref<1x!tpu.dma_semaphore, #tpu.memory_space<semaphore_mem>> -> memref<!tpu.dma_semaphore, #tpu.memory_space<semaphore_mem>>
      tpu.wait_dma2 semaphore(%13 : memref<!tpu.dma_semaphore, #tpu.memory_space<semaphore_mem>>) src(%10 : memref<1x128xf32, #tpu.memory_space<any>>) dst(%11 : memref<1x128xf32, #tpu.memory_space<vmem>>)
    }
    %c16_i32_5 = arith.constant 16 : i32
    %c0 = arith.constant 0 : index
    %c0_6 = arith.constant 0 : index
    %3 = vector.load %arg6[%c0, %c0_6] : memref<16x128xf32, #tpu.memory_space<vmem>>, vector<16x128xf32>
    %c0_7 = arith.constant 0 : index
    %c0_8 = arith.constant 0 : index
    %4 = vector.load %arg4[%c0_7, %c0_8] : memref<16x128xf32, #tpu.memory_space<vmem>>, vector<16x128xf32>
    %5 = arith.addf %3, %4 : vector<16x128xf32>
    %6 = vector.shape_cast %5 : vector<16x128xf32> to vector<1x16x128xf32>
    %c0_9 = arith.constant 0 : index
    %c0_10 = arith.constant 0 : index
    %c0_11 = arith.constant 0 : index
    %7 = vector.load %arg5[%c0_9, %c0_10, %c0_11] : memref<1x16x128xf32, #tpu.memory_space<vmem>>, vector<1x16x128xf32>
    tpu.vector_store %arg5[%c0_9, %c0_10, %c0_11], %6 {strides = array<i32>} : memref<1x16x128xf32, #tpu.memory_space<vmem>>, vector<1x16x128xf32>,
    return
  }
  func.func @transform_1(%arg0: i32, %arg1: i32, %arg2: memref<2x32xi32, #tpu.memory_space<smem>>) -> (i32, i32) {
    %c0_i32 = arith.constant 0 : i32
    %c0_i32_0 = arith.constant 0 : i32
    return %arg1, %c0_i32 : i32, i32
  }
  func.func @transform_2(%arg0: i32, %arg1: i32, %arg2: memref<2x32xi32, #tpu.memory_space<smem>>) -> (i32, i32, i32) {
    %c0_i32 = arith.constant 0 : i32
    %c0_i32_0 = arith.constant 0 : i32
    return %arg0, %arg1, %c0_i32 : i32, i32, i32
  }
}

</mosaic_0001>

<llo_original>
// kernel: tpu_custom_call.1
$region0: #{tpu_custom_call.1}
  #allocation0 [shape = 'u32[]', space=smem, size = 0x4, offset = 0x4, fixed_abs, tag = 'smem constant byte address 0x4 - core index']
  #allocation1 [shape = 'u32[72,128]{1,0:T(1,128)}', space=vmem, size = 0x9000, scoped, tag = 'internal scratch']
  #allocation2 [shape = 'f32[16,128]{1,0:T(8,128)}', space=vmem, size = 0x2000, scoped, tag = 'scratch operand']
  #allocation3 [shape = 's32[16]{0}', space=sflag, size = 0x40, scoped, tag = 'scratch operand']
  #allocation4 [shape = 's32[1]{0}', space=sflag, size = 0x4, scoped, tag = 'scoped memory for tpu_custom_call.1']
  #allocation5 [shape = 'u8[1024]{0}', space=smem, size = 0x400, scoped, tag = 'prefetched SMEM operand 0']
  #allocation10 [shape = 's32[]', space=sflag, size = 0x4, offset = 0, fixed_abs, tag = 'sflag constant byte address 0x0 - dummy sync flag']
  #allocation11 [shape = 's32[]', space=sflag, size = 0x4, offset = 0, fixed_abs, tag = 'sflag constant byte address 0x0 - dummy sync flag']
  #allocation12 [shape = 'u32[]', space=smem, size = 0x4, offset = 0x44, fixed_abs, tag = 'smem constant byte address 0x44 - assertion arg 0']
  #allocation13 [shape = 'u32[]', space=smem, size = 0x4, offset = 0x48, fixed_abs, tag = 'smem constant byte address 0x48 - assertion arg 1']
  %s0 = inlined_call_operand.hbm [shape: s32[2,32], index: 0, kind: input, shape index: {}]
  %s1 = inlined_call_operand.hbm [shape: f32[64,128], index: 1, kind: input, shape index: {}]
  %s2 = inlined_call_operand.hbm [shape: f32[32,128], index: 2, kind: input, shape index: {}]
  %s3 = inlined_call_operand.hbm [shape: f32[2,32,128], index: 3, kind: output, shape index: {}]
  %s4 = sld [smem:[#allocation0]]
  $region59: #{tpu_custom_call.1} parent=0
    _
  %s6 = ssub.s32 1, %s4
  %s7 = scalar_select 0, %s6, %s4
  %s9 = sshll.u32 %s0, 4
  %s10 = int_to_ptr.hbm [resolvable:$true] %s9
  %12 = dma.hbm_to_smem %s10, 32, [#allocation5], [#allocation4]
  %14 = dma.done [#allocation4], 32
  %15 = sfence
  $region1: #{tpu_custom_call.1} parent=0
    #allocation6 [shape = 'u8[16384]{0}', space=vmem, size = 0x4000, scoped, tag = 'input window, operand 2']
    #allocation7 [shape = 's32[2]{0}', space=sflag, size = 0x8, scoped, tag = 'scoped memory for tpu_custom_call.1']
    #allocation8 [shape = 's32[2]{0}', space=sflag, size = 0x8, scoped, tag = 'scoped memory for tpu_custom_call.1']
    #allocation9 [shape = 'u8[16384]{0}', space=vmem, size = 0x4000, scoped, tag = 'output window, operand 0']
    %16 = vsyncpa [#allocation7], 0
    %s17 = scalar_lea.sflag [#allocation7], 1
    %18 = vsyncpa %s17, 0
    %19 = vsyncpa [#allocation8], 0
    %s20 = scalar_lea.sflag [#allocation8], 1
    %21 = vsyncpa %s20, 0
    loop: start=0, step=1, limit=6
    $region2: #{tpu_custom_call.1} parent=1 // loop_pre_header
      _
    $region3: #{tpu_custom_call.1} parent=1 // loop_header
      %s23 = sphi 0, %s27
      %p24 = scmp.ge.s32.totalorder %s23, 6
      %s30 = sphi 0, %s42
      %s31 = sphi 0, %s38
      %s32 = sphi 0, %s30
      %s33 = sphi 0, %s31
      %s34 = sphi 0, %s32
      %s35 = sphi 0, %s33
      %s45 = sphi 0, %s47
      %s48 = sphi 0, %s45
      %s49 = sphi 0, %s48
      %s65 = sphi 0, %s49
      %s73 = sphi 0, %s75
      %s76 = sphi 0, %s73
      %s77 = sphi 0, %s76
      %s93 = sphi 0, %s77
    $region4: #{tpu_custom_call.1} parent=1 // loop_header_branch
      %26 = sbr.rel (%p24) target = $region8
    $region5: #{tpu_custom_call.1} parent=1 // loop_body
      %s28 = ssub.s32 %s23, 1
      %s29 = ssub.s32 %s23, 2
      %s36 = sadd.s32 1, %s31
      %p37 = scmp.ge.s32.totalorder %s36, 2
      %s38 = scalar_select %p37, 0, %s36
      %s39 = sadd.s32 1, %s30
      %s40 = scalar_select %p37, %s39, %s30
      %p41 = scmp.ge.s32.totalorder %s40, 2
      %s42 = scalar_select %p41, 0, %s40
      %s43 = ssub.s32 %s31, %s38
      %p44 = scmp.eq.s32.totalorder %s43, 0
      %s46 = sadd.s32 %s45, 1
      %s47 = scalar_select %p44, %s45, %s46
      %p50 = pneg %p44
      %p51 = scmp.eq.s32.totalorder %s23, 3
      %p52 = por %p50, %p51
      %p53 = scmp.ne.s32.totalorder %s45, %s48
      %p54 = scmp.eq.s32.totalorder %s23, 0
      %p55 = por %p53, %p54
      %p56 = scmp.ne.s32.totalorder %s45, %s48
      %p57 = scmp.eq.s32.totalorder %s28, 3
      %p58 = por %p56, %p57
      %p59 = scmp.ne.s32.totalorder %s48, %s49
      %p60 = scmp.eq.s32.totalorder %s28, 0
      %p61 = por %p59, %p60
      %p62 = scmp.ne.s32.totalorder %s48, %s49
      %p63 = scmp.eq.s32.totalorder %s29, 3
      %p64 = por %p62, %p63
      %p66 = scmp.ne.s32.totalorder %s49, %s65
      %p67 = scmp.eq.s32.totalorder %s29, 0
      %p68 = por %p66, %p67
      %s69 = ssub.s32 %s30, %s42
      %s70 = ssub.s32 %s31, %s38
      %s71 = sor.u32 %s69, %s70
      %p72 = scmp.eq.s32.totalorder %s71, 0
      %s74 = sadd.s32 %s73, 1
      %s75 = scalar_select %p72, %s73, %s74
      %p78 = pneg %p72
      %p79 = scmp.eq.s32.totalorder %s23, 3
      %p80 = por %p78, %p79
      %p81 = scmp.ne.s32.totalorder %s73, %s76
      %p82 = scmp.eq.s32.totalorder %s23, 0
      %p83 = por %p81, %p82
      %p84 = scmp.ne.s32.totalorder %s73, %s76
      %p85 = scmp.eq.s32.totalorder %s28, 3
      %p86 = por %p84, %p85
      %p87 = scmp.ne.s32.totalorder %s76, %s77
      %p88 = scmp.eq.s32.totalorder %s28, 0
      %p89 = por %p87, %p88
      %p90 = scmp.ne.s32.totalorder %s76, %s77
      %p91 = scmp.eq.s32.totalorder %s29, 3
      %p92 = por %p90, %p91
      %p94 = scmp.ne.s32.totalorder %s77, %s93
      %p95 = scmp.eq.s32.totalorder %s29, 0
      %p96 = por %p94, %p95
      %p97 = scmp.le.s32.totalorder 1, %s23
      %p98 = scmp.lt.s32.totalorder %s23, 5
      %p99 = pnand %p97, %p98
      %p100 = pneg %p99
      // Predicated region
      $region9: #{tpu_custom_call.1} parent=5 // pred_check
        _
      $region10: #{tpu_custom_call.1} parent=5 // pred_check_branch
        %102 = sbr.rel (%p99) target = $region12
      $region11: #{tpu_custom_call.1} parent=5 // pred_region
        %s103 = ssub.s32 %s23, 1
      $region12: #{tpu_custom_call.1} parent=5 // pred_fallthru
        _
      %p104 = scmp.lt.s32.totalorder %s23, 4
      // Predicated region
      $region13: #{tpu_custom_call.1} parent=5 // pred_check
        %p105 = pneg %p104
      $region14: #{tpu_custom_call.1} parent=5 // pred_check_branch
        %107 = sbr.rel (%p105) target = $region16
      $region15: #{tpu_custom_call.1} parent=5 // pred_region
        // Predicated region
        $region17: #{tpu_custom_call.1} parent=15 // pred_check
          %p108 = pneg %p55
        $region18: #{tpu_custom_call.1} parent=15 // pred_check_branch
          %110 = sbr.rel (%p108) target = $region20
        $region19: #{tpu_custom_call.1} parent=15 // pred_region
          %s111 = sand.u32 %s45, 1
          %s112 = scalar_lea.sflag [#allocation7], %s111
          %s113 = sand.u32 %s45, 1
          %s114 = smul.addr %s113, 16
          %s115 = scalar_lea.vmem [#allocation6], %s114
          %s116 = smul.u32 2, %s31
          %118 = vsyncadd %s112, 0
          %s119 = smul.addr %s116, 8
          %s120 = scalar_lea.hbm %s2, %s119
          %s121 = sshll.u32 %s120, 4
          %s122 = int_to_ptr.hbm [resolvable:$true] %s121
          %s123 = sshll.u32 %s115, 4
          %s124 = int_to_ptr.vmem [resolvable:$true] %s123
          %129 = dma.hbm_to_vmem [thread:$0]  %s122, 256, %s124, %s112, 128, 128, 8
        $region20: #{tpu_custom_call.1} parent=15 // pred_fallthru
          _
      $region16: #{tpu_custom_call.1} parent=5 // pred_fallthru
        _
      %p130 = scmp.le.s32.totalorder 1, %s23
      %p131 = scmp.lt.s32.totalorder %s23, 5
      %p132 = pnand %p130, %p131
      %p133 = pneg %p132
      // Predicated region
      $region21: #{tpu_custom_call.1} parent=5 // pred_check
        _
      $region22: #{tpu_custom_call.1} parent=5 // pred_check_branch
        %135 = sbr.rel (%p132) target = $region24
      $region23: #{tpu_custom_call.1} parent=5 // pred_region
        %s136 = ssub.s32 %s23, 1
        %s137 = sand.u32 %s48, 1
        %s138 = scalar_lea.sflag [#allocation7], %s137
        %s139 = sand.u32 %s48, 1
        %s140 = smul.addr %s139, 16
        %s141 = scalar_lea.vmem [#allocation6], %s140
        // Predicated region
        $region25: #{tpu_custom_call.1} parent=23 // pred_check
          %p142 = pneg %p61
        $region26: #{tpu_custom_call.1} parent=23 // pred_check_branch
          %144 = sbr.rel (%p142) target = $region28
        $region27: #{tpu_custom_call.1} parent=23 // pred_region
          %146 = dma.done %s138, 256
        $region28: #{tpu_custom_call.1} parent=23 // pred_fallthru
          _
        %s147 = sand.u32 %s48, 1
        %s148 = scalar_lea.sflag [#allocation7], %s147
        %s149 = sand.u32 %s48, 1
        %s150 = smul.addr %s149, 16
        %s151 = scalar_lea.vmem [#allocation6], %s150
        %p152 = pneg %p61
        %p153 = pneg %p58
        %p154 = pneg %p89
        %p155 = pneg %p86
        %s156 = sand.u32 %s76, 1
        %s157 = scalar_lea.sflag [#allocation8], %s156
        %s158 = sand.u32 %s76, 1
        %s159 = smul.addr %s158, 16
        %s160 = scalar_lea.vmem [#allocation9], %s159
        %s161 = smul.u32 2, %s33
        %s162 = smul.u32 2, %s33
        %s163 = smul.u32 %s33, 16
        loop: start=0, step=1, limit=16
        $region29: #{tpu_custom_call.1} parent=23 // loop_pre_header
          _
        $region30: #{tpu_custom_call.1} parent=23 // loop_header
          %s165 = sphi 0, %s169
          %p166 = scmp.ge.s32.totalorder %s165, 16
        $region31: #{tpu_custom_call.1} parent=23 // loop_header_branch
          %168 = sbr.rel (%p166) target = $region35
        $region32: #{tpu_custom_call.1} parent=23 // loop_body
          %s170 = sadd.s32 %s163, %s165
          %s171 = sshra.s32 %s170, 7
          %s172 = sand.u32 %s170, 127
          %s173 = sadd.s32 %s171, %s32
          %s174 = smul.u32 %s173, 128
          %s175 = sshra.s32 %s170, 7
          %s176 = sand.u32 %s170, 127
          %s177 = sadd.s32 %s174, %s176
          %s178 = sld [smem:[#allocation5 + %s177]]
          %p179 = scmp.gt.s32.totalorder %s178, 0
          %s180 = scalar_select %p179, %s178, 0
          %p181 = scmp.lt.s32.totalorder %s180, 63
          %s182 = scalar_select %p181, %s180, 63
          %s183 = scalar_lea.hbm %s1, %s182
          %s184 = scalar_lea.vmem [#allocation2], %s165
          %s185 = scalar_lea.sflag [#allocation3], %s165
          // Predicated region
          $region36: #{tpu_custom_call.1} parent=32 // pred_check
            _
          $region37: #{tpu_custom_call.1} parent=32 // pred_check_branch
            %187 = sbr.rel target = $region39
          $region38: #{tpu_custom_call.1} parent=32 // pred_region
            %188 = sst [smem:[#allocation12]] [#allocation11]
            %189 = sst [smem:[#allocation13]] [#allocation10]
          $region39: #{tpu_custom_call.1} parent=32 // pred_fallthru
            _
          %191 = shalt.err (0)
          %s193 = sshll.u32 %s183, 4
          %s194 = int_to_ptr.hbm [resolvable:$true] %s193
          %s195 = sshll.u32 %s184, 4
          %s196 = int_to_ptr.vmem [resolvable:$true] %s195
          %198 = dma.hbm_to_vmem [thread:$0]  %s194, 16, %s196, %s185
        $region33: #{tpu_custom_call.1} parent=23 // loop_footer
          %s169 = sadd.s32 1, %s165
        $region34: #{tpu_custom_call.1} parent=23 // loop_footer_branch
          %164 = sbr.rel target = $region30
        $region35: #{tpu_custom_call.1} parent=23 // loop_exit
          _
        loop: start=0, step=1, limit=16
        $region40: #{tpu_custom_call.1} parent=23 // loop_pre_header
          _
        $region41: #{tpu_custom_call.1} parent=23 // loop_header
          %s200 = sphi 0, %s204
          %p201 = scmp.ge.s32.totalorder %s200, 16
        $region42: #{tpu_custom_call.1} parent=23 // loop_header_branch
          %203 = sbr.rel (%p201) target = $region46
        $region43: #{tpu_custom_call.1} parent=23 // loop_body
          %s205 = scalar_lea.sflag [#allocation3], %s200
          %s206 = smul.u32 1, 1
          %s207 = sshll.u32 %s206, 4
          %208 = dma.done %s205, %s207
        $region44: #{tpu_custom_call.1} parent=23 // loop_footer
          %s204 = sadd.s32 1, %s200
        $region45: #{tpu_custom_call.1} parent=23 // loop_footer_branch
          %199 = sbr.rel target = $region41
        $region46: #{tpu_custom_call.1} parent=23 // loop_exit
          _
        %v209 = vld [vmem:[#allocation2] sm:$0xff]
        %v210 = vld [vmem:[#allocation2 + $0x8] sm:$0xff]
        %v211 = vld [vmem:[%s141] sm:$0xff]
        %v212 = vld [vmem:[%s141 + $0x8] sm:$0xff]
        %v213 = vadd.f32 %v209, %v211
        %v214 = vadd.f32 %v210, %v212
        %215 = vst [vmem:[%s160] sm:$0xff] %v213
        %216 = vst [vmem:[%s160 + $0x8] sm:$0xff] %v214
        %s217 = sand.u32 %s76, 1
        %s218 = scalar_lea.sflag [#allocation8], %s217
        %s219 = sand.u32 %s76, 1
        %s220 = smul.addr %s219, 16
        %s221 = scalar_lea.vmem [#allocation9], %s220
        // Predicated region
        $region47: #{tpu_custom_call.1} parent=23 // pred_check
          %p222 = pneg %p86
        $region48: #{tpu_custom_call.1} parent=23 // pred_check_branch
          %224 = sbr.rel (%p222) target = $region50
        $region49: #{tpu_custom_call.1} parent=23 // pred_region
          %s225 = smul.u32 2, %s33
          %227 = vsyncadd %s218, 0
          %s228 = smul.addr %s32, 4
          %s229 = sadd.s32 %s225, %s228
          %s230 = smul.addr %s229, 8
          %s231 = scalar_lea.hbm %s3, %s230
          %s232 = sshll.u32 %s221, 4
          %s233 = int_to_ptr.vmem [resolvable:$true] %s232
          %s234 = sshll.u32 %s231, 4
          %s235 = int_to_ptr.hbm [resolvable:$true] %s234
          %240 = dma.vmem_to_hbm [thread:$0]  %s233, 256, %s235, %s218, 128, 128, 8
        $region50: #{tpu_custom_call.1} parent=23 // pred_fallthru
          _
      $region24: #{tpu_custom_call.1} parent=5 // pred_fallthru
        _
      %p241 = scmp.le.s32.totalorder 2, %s23
      // Predicated region
      $region51: #{tpu_custom_call.1} parent=5 // pred_check
        %p242 = pneg %p241
      $region52: #{tpu_custom_call.1} parent=5 // pred_check_branch
        %244 = sbr.rel (%p242) target = $region54
      $region53: #{tpu_custom_call.1} parent=5 // pred_region
        %s245 = ssub.s32 %s23, 2
        // Predicated region
        $region55: #{tpu_custom_call.1} parent=53 // pred_check
          %p246 = pneg %p92
        $region56: #{tpu_custom_call.1} parent=53 // pred_check_branch
          %248 = sbr.rel (%p246) target = $region58
        $region57: #{tpu_custom_call.1} parent=53 // pred_region
          %s249 = sand.u32 %s77, 1
          %s250 = scalar_lea.sflag [#allocation8], %s249
          %s251 = sand.u32 %s77, 1
          %s252 = smul.addr %s251, 16
          %s253 = scalar_lea.vmem [#allocation9], %s252
          %255 = dma.done %s250, 256
        $region58: #{tpu_custom_call.1} parent=53 // pred_fallthru
          _
      $region54: #{tpu_custom_call.1} parent=5 // pred_fallthru
        _
    $region6: #{tpu_custom_call.1} parent=1 // loop_footer
      %s27 = sadd.s32 1, %s23
    $region7: #{tpu_custom_call.1} parent=1 // loop_footer_branch
      %22 = sbr.rel target = $region3
    $region8: #{tpu_custom_call.1} parent=1 // loop_exit
      _
    %256 = vsyncpa [#allocation7], 1
    %s257 = scalar_lea.sflag [#allocation7], 1
    %258 = vsyncpa %s257, 1
    %259 = vsyncpa [#allocation8], 1
    %s260 = scalar_lea.sflag [#allocation8], 1
    %261 = vsyncpa %s260, 1
  %262 = vsyncmov [#allocation3]
  %s263 = vpop.sfrf %262
  %p264 = scmp.eq.s32.totalorder %s263, 0
  %p265 = pneg %p264
  %267 = shalt.err (%p265)
  %s268 = scalar_lea.sflag [#allocation3], 1
  %269 = vsyncmov %s268
  %s270 = vpop.sfrf %269
  %p271 = scmp.eq.s32.totalorder %s270, 0
  %p272 = pneg %p271
  %274 = shalt.err (%p272)
  %s275 = scalar_lea.sflag [#allocation3], 2
  %276 = vsyncmov %s275
  %s277 = vpop.sfrf %276
  %p278 = scmp.eq.s32.totalorder %s277, 0
  %p279 = pneg %p278
  %281 = shalt.err (%p279)
  %s282 = scalar_lea.sflag [#allocation3], 3
  %283 = vsyncmov %s282
  %s284 = vpop.sfrf %283
  %p285 = scmp.eq.s32.totalorder %s284, 0
  %p286 = pneg %p285
  %288 = shalt.err (%p286)
  %s289 = scalar_lea.sflag [#allocation3], 4
  %290 = vsyncmov %s289
  %s291 = vpop.sfrf %290
  %p292 = scmp.eq.s32.totalorder %s291, 0
  %p293 = pneg %p292
  %295 = shalt.err (%p293)
  %s296 = scalar_lea.sflag [#allocation3], 5
  %297 = vsyncmov %s296
  %s298 = vpop.sfrf %297
  %p299 = scmp.eq.s32.totalorder %s298, 0
  %p300 = pneg %p299
  %302 = shalt.err (%p300)
  %s303 = scalar_lea.sflag [#allocation3], 6
  %304 = vsyncmov %s303
  %s305 = vpop.sfrf %304
  %p306 = scmp.eq.s32.totalorder %s305, 0
  %p307 = pneg %p306
  %309 = shalt.err (%p307)
  %s310 = scalar_lea.sflag [#allocation3], 7
  %311 = vsyncmov %s310
  %s312 = vpop.sfrf %311
  %p313 = scmp.eq.s32.totalorder %s312, 0
  %p314 = pneg %p313
  %316 = shalt.err (%p314)
  %s317 = scalar_lea.sflag [#allocation3], 8
  %318 = vsyncmov %s317
  %s319 = vpop.sfrf %318
  %p320 = scmp.eq.s32.totalorder %s319, 0
  %p321 = pneg %p320
  %323 = shalt.err (%p321)
  %s324 = scalar_lea.sflag [#allocation3], 9
  %325 = vsyncmov %s324
  %s326 = vpop.sfrf %325
  %p327 = scmp.eq.s32.totalorder %s326, 0
  %p328 = pneg %p327
  %330 = shalt.err (%p328)
  %s331 = scalar_lea.sflag [#allocation3], 10
  %332 = vsyncmov %s331
  %s333 = vpop.sfrf %332
  %p334 = scmp.eq.s32.totalorder %s333, 0
  %p335 = pneg %p334
  %337 = shalt.err (%p335)
  %s338 = scalar_lea.sflag [#allocation3], 11
  %339 = vsyncmov %s338
  %s340 = vpop.sfrf %339
  %p341 = scmp.eq.s32.totalorder %s340, 0
  %p342 = pneg %p341
  %344 = shalt.err (%p342)
  %s345 = scalar_lea.sflag [#allocation3], 12
  %346 = vsyncmov %s345
  %s347 = vpop.sfrf %346
  %p348 = scmp.eq.s32.totalorder %s347, 0
  %p349 = pneg %p348
  %351 = shalt.err (%p349)
  %s352 = scalar_lea.sflag [#allocation3], 13
  %353 = vsyncmov %s352
  %s354 = vpop.sfrf %353
  %p355 = scmp.eq.s32.totalorder %s354, 0
  %p356 = pneg %p355
  %358 = shalt.err (%p356)
  %s359 = scalar_lea.sflag [#allocation3], 14
  %360 = vsyncmov %s359
  %s361 = vpop.sfrf %360
  %p362 = scmp.eq.s32.totalorder %s361, 0
  %p363 = pneg %p362
  %365 = shalt.err (%p363)
  %s366 = scalar_lea.sflag [#allocation3], 15
  %367 = vsyncmov %s366
  %s368 = vpop.sfrf %367
  %p369 = scmp.eq.s32.totalorder %s368, 0
  %p370 = pneg %p369
  %372 = shalt.err (%p370)

</llo_original>
